<compile_context>
chip_gen: v7x
topology: tpu7x:2x2x1
jax: 0.10.0
libtpu: 0.0.40
codegen_flags: <defaults>
</compile_context>

<pallas_src>
import jax
import jax.numpy as jnp
from jax.experimental import pallas as pl
from jax.experimental.pallas import tpu as pltpu

BN_EPS = 1e-5
_LANE = 128


def _bn_relu(h, gamma, beta):
    """Fused BatchNorm1d (training-mode batch stats, biased var, eps=1e-5) + ReLU, in f32.

    Folded into one scale/shift: y = max((h - mean) * (gamma * rsqrt(var+eps)) + beta, 0).
    rsqrt lands on the EUP slot; centered two-pass variance kept for stability.
    """
    mean = jnp.mean(h, axis=0, keepdims=True)            # [1, F]
    hc = h - mean
    var = jnp.mean(hc * hc, axis=0, keepdims=True)       # biased variance
    scale = gamma * jax.lax.rsqrt(var + BN_EPS)
    return jnp.maximum(hc * scale + beta, 0.0)


def _cost_estimate(B, in_dim, hid, out_pad, x_dtype, w_dtype, out_dtype):
    flops = 2 * B * in_dim * hid + 2 * B * hid * out_pad + 8 * B * hid   # GEMMs + BN/ReLU
    bytes_accessed = (B * in_dim * jnp.dtype(x_dtype).itemsize
                      + in_dim * hid * jnp.dtype(w_dtype).itemsize
                      + hid * out_pad * jnp.dtype(w_dtype).itemsize
                      + (2 * hid + out_pad) * 4
                      + B * out_pad * jnp.dtype(out_dtype).itemsize)
    return pl.CostEstimate(flops=int(flops), transcendentals=int(hid),
                           bytes_accessed=int(bytes_accessed))


# ---------------------------------------------------------------------------
# Monolithic (no-grid) kernel: for small shapes where fixed overhead dominates.
# ---------------------------------------------------------------------------
def _fused_kernel(x_ref, w1_ref, gamma_ref, beta_ref, w2_ref, b2_ref, o_ref):
    h = jnp.dot(x_ref[...], w1_ref[...], preferred_element_type=jnp.float32)   # [B, HID] f32
    h = _bn_relu(h, gamma_ref[...], beta_ref[...])
    out = jnp.dot(h.astype(w2_ref.dtype), w2_ref[...],
                  preferred_element_type=jnp.float32)                           # [B, OUT_PAD] f32
    o_ref[...] = (out + b2_ref[...]).astype(o_ref.dtype)


def _projection_head_fused(x, w1t, gamma, beta, w2pt, b2, out_dtype):
    B, in_dim = x.shape
    hid, out_pad = w2pt.shape
    vmem = pltpu.MemorySpace.VMEM
    return pl.pallas_call(
        _fused_kernel,
        out_shape=jax.ShapeDtypeStruct((B, out_pad), out_dtype),
        in_specs=[pl.BlockSpec(memory_space=vmem) for _ in range(6)],
        out_specs=pl.BlockSpec(memory_space=vmem),
        cost_estimate=_cost_estimate(B, in_dim, hid, out_pad, x.dtype, w1t.dtype, out_dtype),
    )(x, w1t, gamma, beta, w2pt, b2)


# ---------------------------------------------------------------------------
# Tiled kernel: 1-D grid over HID k-tiles, whole lane-padded OUT per step,
# f32 VMEM accumulator. BN stats are per-feature over the (untiled) batch dim,
# so each HID k-tile's batch statistics are already the full-batch statistics.
# ---------------------------------------------------------------------------
def _tiled_kernel(x_ref, w1_ref, gamma_ref, beta_ref, w2_ref, b2_ref, o_ref, acc_ref):
    k = pl.program_id(0)

    @pl.when(k == 0)
    def _init():
        acc_ref[...] = jnp.broadcast_to(b2_ref[...].astype(jnp.float32), acc_ref.shape)

    # GEMM1 k-slab: [B, tk], f32 accumulation even for bf16 inputs.
    h = jnp.dot(x_ref[...], w1_ref[...], preferred_element_type=jnp.float32)
    # gamma/beta are fully resident as [n_k, 1, tk]; dynamic index on the leading axis.
    h = _bn_relu(h, gamma_ref[k], beta_ref[k])
    # GEMM2 partial product, accumulated into the lane-dense [B, OUT_PAD] f32 scratch.
    acc_ref[...] += jnp.dot(h.astype(w2_ref.dtype), w2_ref[...],
                            preferred_element_type=jnp.float32)

    @pl.when(k == pl.num_programs(0) - 1)
    def _store():
        o_ref[...] = acc_ref[...].astype(o_ref.dtype)


def _tiled_vmem_limit(B, in_dim, hid, tk, out_pad, x_dtype, w_dtype, out_dtype):
    """Scoped-VMEM budget sized from the actual buffers (with headroom); defaults are
    only 16/32 MiB on v5e / v6e+v7x, far below physical."""
    xb = jnp.dtype(x_dtype).itemsize
    wb = jnp.dtype(w_dtype).itemsize
    ob = jnp.dtype(out_dtype).itemsize
    n_k = hid // tk
    need = (B * in_dim * xb              # x, Buffered(1) (constant block index)
            + 2 * in_dim * tk * wb       # w1 k-tile, double-buffered
            + 2 * tk * out_pad * wb      # w2 k-tile, double-buffered
            + 2 * n_k * 8 * tk * 4       # gamma + beta, resident (sublane-padded)
            + 8 * out_pad * 4            # b2, resident
            + 2 * B * out_pad * ob       # output block
            + B * out_pad * 4)           # f32 accumulator scratch
    limit = 2 * need + (8 << 20)
    return int(min(max(limit, 32 << 20), 96 << 20))


def _projection_head_tiled(x, w1t, gamma, beta, w2pt, b2, out_dtype, *, tk):
    B, in_dim = x.shape
    hid, out_pad = w2pt.shape
    n_k = hid // tk
    gamma_r = gamma.reshape(n_k, 1, tk)   # resident k-sliced view of [1, HID]
    beta_r = beta.reshape(n_k, 1, tk)
    single = pl.Buffered(1)               # constant block index -> no double-buffering
    return pl.pallas_call(
        _tiled_kernel,
        out_shape=jax.ShapeDtypeStruct((B, out_pad), out_dtype),
        grid_spec=pltpu.PrefetchScalarGridSpec(
            num_scalar_prefetch=0,
            grid=(n_k,),
            in_specs=[
                pl.BlockSpec((B, in_dim), lambda k: (0, 0), pipeline_mode=single),   # x resident
                pl.BlockSpec((in_dim, tk), lambda k: (0, k)),                        # w1t k-tile
                pl.BlockSpec((n_k, 1, tk), lambda k: (0, 0, 0), pipeline_mode=single),  # gamma
                pl.BlockSpec((n_k, 1, tk), lambda k: (0, 0, 0), pipeline_mode=single),  # beta
                pl.BlockSpec((tk, out_pad), lambda k: (k, 0)),                       # w2t k-tile
                pl.BlockSpec((1, out_pad), lambda k: (0, 0), pipeline_mode=single),  # b2
            ],
            out_specs=pl.BlockSpec((B, out_pad), lambda k: (0, 0)),
            scratch_shapes=[pltpu.VMEM((B, out_pad), jnp.float32)],
        ),
        compiler_params=pltpu.CompilerParams(
            dimension_semantics=("arbitrary",),   # k is a reduction axis
            vmem_limit_bytes=_tiled_vmem_limit(B, in_dim, hid, tk, out_pad,
                                               x.dtype, w1t.dtype, out_dtype),
        ),
        cost_estimate=_cost_estimate(B, in_dim, hid, out_pad, x.dtype, w1t.dtype, out_dtype),
    )(x, w1t, gamma_r, beta_r, w2pt, b2)


# ---------------------------------------------------------------------------
# Parameter prep (one-time, outside the hot path) + public forward.
# ---------------------------------------------------------------------------
def prepare_params(w1, gamma, beta, w2, b2, *, lane=_LANE, compute_dtype=None):
    """One-time parameter prep (do this at init, NOT per forward call):
      * transposes both Linear weights into the MXU-native [K, N] orientation,
      * lane-pads the final output dim to a multiple of 128 (unmasked vst),
      * stores BN gamma/beta and the final bias as f32 rows,
      * optionally casts the weight matrices to `compute_dtype` (e.g. jnp.bfloat16)
        so the MXU runs at bf16 rate; BN stats / accumulation stay f32."""
    w1 = jnp.asarray(w1)                                  # torch layout [HID, IN]
    w2 = jnp.asarray(w2)                                  # torch layout [OUT, HID]
    hid = w1.shape[0]
    out_dim = w2.shape[0]
    out_pad = ((out_dim + lane - 1) // lane) * lane
    w1t = jnp.transpose(w1)                               # [IN, HID]
    w2pt = jnp.zeros((hid, out_pad), w2.dtype).at[:, :out_dim].set(jnp.transpose(w2))
    if compute_dtype is not None:
        w1t = w1t.astype(compute_dtype)
        w2pt = w2pt.astype(compute_dtype)
    gamma2 = jnp.asarray(gamma).reshape(1, hid).astype(jnp.float32)
    beta2 = jnp.asarray(beta).reshape(1, hid).astype(jnp.float32)
    b2p = (jnp.zeros((1, out_pad), jnp.float32)
           .at[0, :out_dim].set(jnp.asarray(b2).astype(jnp.float32)))
    return {"w1t": w1t, "gamma": gamma2, "beta": beta2, "w2pt": w2pt, "b2": b2p,
            "out_dim": out_dim, "compute_dtype": compute_dtype}


def projection_head(x, params, *, tk=256):
    """ProjectionHead forward: Linear(no bias) -> BN(batch stats) -> ReLU -> Linear(+bias).

    `params` comes from prepare_params(). Dispatches between a monolithic no-grid
    kernel (toy shapes) and a 1-D HID-tiled grid kernel with an f32 VMEM accumulator.
    """
    x = jnp.asarray(x)
    out_dtype = x.dtype
    if params["compute_dtype"] is not None and x.dtype != params["compute_dtype"]:
        x = x.astype(params["compute_dtype"])
    w1t, gamma, beta = params["w1t"], params["gamma"], params["beta"]
    w2pt, b2 = params["w2pt"], params["b2"]
    hid, _ = w2pt.shape

    # Largest k-tile (256 fills the 2x256-wide MXU on v6e/v7x; 128 still fine on
    # v5e's 4x128 MXU) that divides HID and leaves at least 2 grid steps.
    k_tile = None
    for cand in dict.fromkeys((tk, 256, 128)):
        if cand and hid % cand == 0 and hid // cand >= 2:
            k_tile = cand
            break

    # TODO(synk): very large batches need a batch-tiled two-phase BN (stats pass +
    # apply pass) and batch-sharding across the two v7x TensorCores; out of scope here.
    if k_tile is not None:
        out = _projection_head_tiled(x, w1t, gamma, beta, w2pt, b2, out_dtype, tk=k_tile)
    else:
        out = _projection_head_fused(x, w1t, gamma, beta, w2pt, b2, out_dtype)
    return out[:, :params["out_dim"]]


# ---------------------------------------------------------------------------
# Plain-JAX reference mirroring the PyTorch forward (training-mode BN).
# ---------------------------------------------------------------------------
def _reference(x, w1, gamma, beta, w2, b2):
    f32 = jnp.float32
    hi = jax.lax.Precision.HIGHEST
    h = jnp.dot(x.astype(f32), w1.astype(f32).T, precision=hi)
    mean = jnp.mean(h, axis=0, keepdims=True)
    var = jnp.mean((h - mean) ** 2, axis=0, keepdims=True)
    h = (h - mean) / jnp.sqrt(var + BN_EPS) * gamma[None, :] + beta[None, :]
    h = jnp.maximum(h, 0.0)
    return jnp.dot(h, w2.astype(f32).T, precision=hi) + b2[None, :]


if __name__ == "__main__":
    def make_case(key, B, in_dim, hid, out_dim):
        kx, kw1, kw2, kb2, kg, kbt = jax.random.split(key, 6)
        x = jax.random.normal(kx, (B, in_dim), dtype=jnp.float32)
        bound1 = 1.0 / (in_dim ** 0.5)
        w1 = jax.random.uniform(kw1, (hid, in_dim), jnp.float32, -bound1, bound1)
        gamma = jax.random.uniform(kg, (hid,), jnp.float32, 0.5, 1.5)   # BN weight
        beta = 0.1 * jax.random.normal(kbt, (hid,), jnp.float32)        # BN bias
        bound2 = 1.0 / (hid ** 0.5)
        w2 = jax.random.uniform(kw2, (out_dim, hid), jnp.float32, -bound2, bound2)
        b2 = jax.random.uniform(kb2, (out_dim,), jnp.float32, -bound2, bound2)
        return x, w1, gamma, beta, w2, b2

    key = jax.random.PRNGKey(0)
    k1, k2 = jax.random.split(key)

    # Case 1: toy shapes -> monolithic no-grid fused kernel (everything resident in VMEM).
    x, w1, gamma, beta, w2, b2 = make_case(k1, 8, 32, 32, 16)
    params = prepare_params(w1, gamma, beta, w2, b2)
    out = jax.block_until_ready(projection_head(x, params))
    ref = _reference(x, w1, gamma, beta, w2, b2)
    assert out.shape == ref.shape, (out.shape, ref.shape)
    assert jnp.allclose(out, ref, atol=5e-2, rtol=5e-2), float(jnp.max(jnp.abs(out - ref)))

    # Case 2: docstring-style shapes, f32 weights -> 1-D k-tiled grid (tk=256, 2 steps).
    x, w1, gamma, beta, w2, b2 = make_case(k2, 256, 256, 512, 256)
    params = prepare_params(w1, gamma, beta, w2, b2)
    out = jax.block_until_ready(projection_head(x, params))
    ref = _reference(x, w1, gamma, beta, w2, b2)
    assert out.shape == ref.shape, (out.shape, ref.shape)
    assert jnp.allclose(out, ref, atol=5e-2, rtol=5e-2), float(jnp.max(jnp.abs(out - ref)))

    # Case 3: same shapes with bf16 MXU feed (f32 BN statistics / accumulation).
    params_bf16 = prepare_params(w1, gamma, beta, w2, b2, compute_dtype=jnp.bfloat16)
    out_bf16 = jax.block_until_ready(projection_head(x, params_bf16))
    assert out_bf16.shape == ref.shape, (out_bf16.shape, ref.shape)
    assert jnp.allclose(out_bf16, ref, atol=1.5e-1, rtol=1.5e-1), \
        float(jnp.max(jnp.abs(out_bf16 - ref)))

    print("KERNEL_OK")
</pallas_src>

<mosaic_0001>
module attributes {stable_mosaic.version = 11 : i64} {
  func.func @_fused_kernel(%arg0: memref<8x32xf32, #tpu.memory_space<vmem>>, %arg1: memref<32x32xf32, #tpu.memory_space<vmem>>, %arg2: memref<1x32xf32, #tpu.memory_space<vmem>>, %arg3: memref<1x32xf32, #tpu.memory_space<vmem>>, %arg4: memref<32x128xf32, #tpu.memory_space<vmem>>, %arg5: memref<1x128xf32, #tpu.memory_space<vmem>>, %arg6: memref<8x128xf32, #tpu.memory_space<vmem>>) attributes {dimension_semantics = [], scalar_prefetch = 0 : i64, scratch_operands = 0 : i64, tpu.core_type = #tpu.core_type<tc>} {
    %c0 = arith.constant 0 : index
    %c0_0 = arith.constant 0 : index
    %0 = vector.load %arg0[%c0, %c0_0] : memref<8x32xf32, #tpu.memory_space<vmem>>, vector<8x32xf32>
    %c0_1 = arith.constant 0 : index
    %c0_2 = arith.constant 0 : index
    %1 = vector.load %arg1[%c0_1, %c0_2] : memref<32x32xf32, #tpu.memory_space<vmem>>, vector<32x32xf32>
    %cst = arith.constant dense<0.000000e+00> : vector<8x32xf32>
    %2 = tpu.matmul %0, %1, %cst {dimension_numbers = #tpu.dot_dimension_numbers<[1], [0], [0], [1], [0, 0, 1, 1], [], []>} : vector<8x32xf32>, vector<32x32xf32>, vector<8x32xf32> -> vector<8x32xf32>
    %c0_3 = arith.constant 0 : index
    %c0_4 = arith.constant 0 : index
    %3 = vector.load %arg2[%c0_3, %c0_4] : memref<1x32xf32, #tpu.memory_space<vmem>>, vector<1x32xf32>
    %c0_5 = arith.constant 0 : index
    %c0_6 = arith.constant 0 : index
    %4 = vector.load %arg3[%c0_5, %c0_6] : memref<1x32xf32, #tpu.memory_space<vmem>>, vector<1x32xf32>
    %cst_7 = arith.constant dense<0.000000e+00> : vector<32xf32>
    %5 = vector.multi_reduction <add>, %2, %cst_7 [0] : vector<8x32xf32> to vector<32xf32>
    %6 = vector.shape_cast %5 : vector<32xf32> to vector<1x32xf32>
    %cst_8 = arith.constant 8.000000e+00 : f32
    %7 = vector.broadcast %cst_8 : f32 to vector<1x32xf32>
    %8 = arith.divf %6, %7 : vector<1x32xf32>
    %9 = vector.broadcast %8 : vector<1x32xf32> to vector<8x32xf32>
    %10 = arith.subf %2, %9 : vector<8x32xf32>
    %11 = arith.mulf %10, %10 : vector<8x32xf32>
    %cst_9 = arith.constant dense<0.000000e+00> : vector<32xf32>
    %12 = vector.multi_reduction <add>, %11, %cst_9 [0] : vector<8x32xf32> to vector<32xf32>
    %13 = vector.shape_cast %12 : vector<32xf32> to vector<1x32xf32>
    %cst_10 = arith.constant 8.000000e+00 : f32
    %14 = vector.broadcast %cst_10 : f32 to vector<1x32xf32>
    %15 = arith.divf %13, %14 : vector<1x32xf32>
    %cst_11 = arith.constant 9.99999974E-6 : f32
    %16 = vector.broadcast %cst_11 : f32 to vector<1x32xf32>
    %17 = arith.addf %15, %16 : vector<1x32xf32>
    %18 = math.rsqrt %17 : vector<1x32xf32>
    %19 = arith.mulf %3, %18 : vector<1x32xf32>
    %20 = vector.broadcast %19 : vector<1x32xf32> to vector<8x32xf32>
    %21 = arith.mulf %10, %20 : vector<8x32xf32>
    %22 = vector.broadcast %4 : vector<1x32xf32> to vector<8x32xf32>
    %23 = arith.addf %21, %22 : vector<8x32xf32>
    %cst_12 = arith.constant 0.000000e+00 : f32
    %24 = vector.broadcast %cst_12 : f32 to vector<8x32xf32>
    %25 = arith.maximumf %23, %24 : vector<8x32xf32>
    %c0_13 = arith.constant 0 : index
    %c0_14 = arith.constant 0 : index
    %26 = vector.load %arg4[%c0_13, %c0_14] : memref<32x128xf32, #tpu.memory_space<vmem>>, vector<32x128xf32>
    %cst_15 = arith.constant dense<0.000000e+00> : vector<8x128xf32>
    %27 = tpu.matmul %25, %26, %cst_15 {dimension_numbers = #tpu.dot_dimension_numbers<[1], [0], [0], [1], [0, 0, 1, 1], [], []>} : vector<8x32xf32>, vector<32x128xf32>, vector<8x128xf32> -> vector<8x128xf32>
    %c0_16 = arith.constant 0 : index
    %c0_17 = arith.constant 0 : index
    %28 = vector.load %arg5[%c0_16, %c0_17] : memref<1x128xf32, #tpu.memory_space<vmem>>, vector<1x128xf32>
    %29 = vector.broadcast %28 : vector<1x128xf32> to vector<8x128xf32>
    %30 = arith.addf %27, %29 : vector<8x128xf32>
    %c0_18 = arith.constant 0 : index
    %c0_19 = arith.constant 0 : index
    %31 = vector.load %arg6[%c0_18, %c0_19] : memref<8x128xf32, #tpu.memory_space<vmem>>, vector<8x128xf32>
    tpu.vector_store %arg6[%c0_18, %c0_19], %30 {strides = array<i32>} : memref<8x128xf32, #tpu.memory_space<vmem>>, vector<8x128xf32>,
    return
  }
}

</mosaic_0001>

<llo_original>
// kernel: tpu_custom_call.1
$region0: #{tpu_custom_call.1}
  #allocation0 [shape = 'u32[]', space=smem, size = 0x4, offset = 0x4, fixed_abs, tag = 'smem constant byte address 0x4 - core index']
  #allocation1 [shape = 'u32[144,128]{1,0:T(1,128)}', space=vmem, size = 0x12000, scoped, tag = 'internal scratch']
  %s0 = inlined_call_operand.hbm [shape: f32[8,32], index: 0, kind: input, shape index: {}]
  %s1 = inlined_call_operand.hbm [shape: f32[32,32], index: 1, kind: input, shape index: {}]
  %s2 = inlined_call_operand.vmem [shape: f32[1,32], index: 2, kind: input, shape index: {}]
  %s3 = inlined_call_operand.vmem [shape: f32[1,32], index: 3, kind: input, shape index: {}]
  %s4 = inlined_call_operand.hbm [shape: f32[32,128], index: 4, kind: input, shape index: {}]
  %s5 = inlined_call_operand.vmem [shape: f32[1,128], index: 5, kind: input, shape index: {}]
  %s6 = inlined_call_operand.hbm [shape: f32[8,128], index: 6, kind: output, shape index: {}]
  %s7 = sld [smem:[#allocation0]]
  $region46: #{tpu_custom_call.1} parent=0
    _
  %s9 = ssub.s32 1, %s7
  %s10 = scalar_select 0, %s9, %s7
  $region1: #{tpu_custom_call.1} parent=0
    #allocation2 [shape = 'u8[4096]{0}', space=vmem, size = 0x1000, scoped, tag = 'input window, operand 0, single buffered']
    #allocation3 [shape = 's32[1]{0}', space=sflag, size = 0x4, scoped, tag = 'scoped memory for tpu_custom_call.1']
    #allocation4 [shape = 's32[1]{0}', space=sflag, size = 0x4, scoped, tag = 'scoped memory for tpu_custom_call.1']
    #allocation5 [shape = 'u8[16384]{0}', space=vmem, size = 0x4000, scoped, tag = 'input window, operand 1, single buffered']
    #allocation6 [shape = 's32[1]{0}', space=sflag, size = 0x4, scoped, tag = 'scoped memory for tpu_custom_call.1']
    #allocation7 [shape = 'u8[16384]{0}', space=vmem, size = 0x4000, scoped, tag = 'input window, operand 4, single buffered']
    #allocation8 [shape = 'u8[4096]{0}', space=vmem, size = 0x1000, scoped, tag = 'output window, operand 0, single buffered']
    %11 = vsyncpa [#allocation3], 0
    %12 = vsyncpa [#allocation6], 0
    %13 = vsyncpa [#allocation4], 0
    // Predicated region
    $region2: #{tpu_custom_call.1} parent=1 // pred_check
      _
    $region3: #{tpu_custom_call.1} parent=1 // pred_check_branch
      %15 = sbr.rel (0) target = $region5
    $region4: #{tpu_custom_call.1} parent=1 // pred_region
      %s17 = ssub.s32 128, 128
      %18 = vsyncadd [#allocation3], %s17
      %s20 = sshll.u32 [#allocation2], 4
      %s21 = int_to_ptr.vmem [resolvable:$true] %s20
      %23 = dma.hbm_to_vmem [thread:$0]  %s0, 128, %s21, [#allocation3]
    $region5: #{tpu_custom_call.1} parent=1 // pred_fallthru
      _
    // Predicated region
    $region6: #{tpu_custom_call.1} parent=1 // pred_check
      _
    $region7: #{tpu_custom_call.1} parent=1 // pred_check_branch
      %25 = sbr.rel (0) target = $region9
    $region8: #{tpu_custom_call.1} parent=1 // pred_region
      %s27 = ssub.s32 512, 512
      %28 = vsyncadd [#allocation6], %s27
      %s29 = sshll.u32 [#allocation5], 4
      %s30 = int_to_ptr.vmem [resolvable:$true] %s29
      %35 = dma.hbm_to_vmem [thread:$0]  %s1, 512, %s30, [#allocation6], 128, 128, 8
    $region9: #{tpu_custom_call.1} parent=1 // pred_fallthru
      _
    // Predicated region
    $region10: #{tpu_custom_call.1} parent=1 // pred_check
      _
    $region11: #{tpu_custom_call.1} parent=1 // pred_check_branch
      %37 = sbr.rel (0) target = $region13
    $region12: #{tpu_custom_call.1} parent=1 // pred_region
      _
    $region13: #{tpu_custom_call.1} parent=1 // pred_fallthru
      _
    // Predicated region
    $region14: #{tpu_custom_call.1} parent=1 // pred_check
      _
    $region15: #{tpu_custom_call.1} parent=1 // pred_check_branch
      %39 = sbr.rel (0) target = $region17
    $region16: #{tpu_custom_call.1} parent=1 // pred_region
      _
    $region17: #{tpu_custom_call.1} parent=1 // pred_fallthru
      _
    // Predicated region
    $region18: #{tpu_custom_call.1} parent=1 // pred_check
      _
    $region19: #{tpu_custom_call.1} parent=1 // pred_check_branch
      %41 = sbr.rel (0) target = $region21
    $region20: #{tpu_custom_call.1} parent=1 // pred_region
      %s43 = ssub.s32 512, 512
      %44 = vsyncadd [#allocation6], %s43
      %s45 = sshll.u32 [#allocation7], 4
      %s46 = int_to_ptr.vmem [resolvable:$true] %s45
      %51 = dma.hbm_to_vmem [thread:$0]  %s4, 512, %s46, [#allocation6], 128, 128, 8
    $region21: #{tpu_custom_call.1} parent=1 // pred_fallthru
      _
    // Predicated region
    $region22: #{tpu_custom_call.1} parent=1 // pred_check
      _
    $region23: #{tpu_custom_call.1} parent=1 // pred_check_branch
      %53 = sbr.rel (0) target = $region25
    $region24: #{tpu_custom_call.1} parent=1 // pred_region
      _
    $region25: #{tpu_custom_call.1} parent=1 // pred_fallthru
      _
    // Predicated region
    $region26: #{tpu_custom_call.1} parent=1 // pred_check
      _
    $region27: #{tpu_custom_call.1} parent=1 // pred_check_branch
      %55 = sbr.rel (0) target = $region29
    $region28: #{tpu_custom_call.1} parent=1 // pred_region
      %56 = dma.done [#allocation3], 128
    $region29: #{tpu_custom_call.1} parent=1 // pred_fallthru
      _
    // Predicated region
    $region30: #{tpu_custom_call.1} parent=1 // pred_check
      _
    $region31: #{tpu_custom_call.1} parent=1 // pred_check_branch
      %58 = sbr.rel (0) target = $region33
    $region32: #{tpu_custom_call.1} parent=1 // pred_region
      %59 = dma.done [#allocation6], 512
    $region33: #{tpu_custom_call.1} parent=1 // pred_fallthru
      _
    // Predicated region
    $region34: #{tpu_custom_call.1} parent=1 // pred_check
      _
    $region35: #{tpu_custom_call.1} parent=1 // pred_check_branch
      %61 = sbr.rel (0) target = $region37
    $region36: #{tpu_custom_call.1} parent=1 // pred_region
      %62 = dma.done [#allocation6], 512
    $region37: #{tpu_custom_call.1} parent=1 // pred_fallthru
      _
    %v63 = vld [vmem:[#allocation2] sm:$0xff]
    %v64 = vld [vmem:[#allocation5] sm:$0xff]
    %v65 = vld [vmem:[#allocation5 + $0x8] sm:$0xff]
    %v66 = vld [vmem:[#allocation5 + $0x10] sm:$0xff]
    %v67 = vld [vmem:[#allocation5 + $0x18] sm:$0xff]
    %vm68 = vcmask 261120
    %v70 = vsel %vm68, %v63, 0
    %72 = vmatprep.subr.mxu0 0.0
    %73 = vmatpush1.msra.mxu0 %v64
    %74 = vmatprep.subr.mxu0 0.0
    %75 = vmatpush1.msra.mxu0 %v65
    %76 = vmatprep.subr.mxu0 0.0
    %77 = vmatpush1.msra.mxu0 %v66
    %78 = vmatprep.subr.mxu0 0.0
    %79 = vmatpush1.msra.mxu0 %v67
    %80 = vmatprep.subr.mxu0 0.0
    %81 = vmatpush1.msra.mxu0 0.0
    %82 = vmatprep.subr.mxu0 0.0
    %83 = vmatpush1.msra.mxu0 0.0
    %84 = vmatprep.subr.mxu0 0.0
    %85 = vmatpush1.msra.mxu0 0.0
    %86 = vmatprep.subr.mxu0 0.0
    %87 = vmatpush1.msra.mxu0 0.0
    %88 = vmatprep.subr.mxu0 0.0
    %89 = vmatpush1.msra.mxu0 0.0
    %90 = vmatprep.subr.mxu0 0.0
    %91 = vmatpush1.msra.mxu0 0.0
    %92 = vmatprep.subr.mxu0 0.0
    %93 = vmatpush1.msra.mxu0 0.0
    %94 = vmatprep.subr.mxu0 0.0
    %95 = vmatpush1.msra.mxu0 0.0
    %96 = vmatprep.subr.mxu0 0.0
    %97 = vmatpush1.msra.mxu0 0.0
    %98 = vmatprep.subr.mxu0 0.0
    %99 = vmatpush1.msra.mxu0 0.0
    %100 = vmatprep.subr.mxu0 0.0
    %101 = vmatpush1.msra.mxu0 0.0
    %102 = vmatprep.subr.mxu0 0.0
    %103 = vmatpush1.msra.mxu0 0.0
    %104 = vmatprep.subr.mxu0 0.0
    %105 = vmatpush1.msra.mxu0 0.0
    %106 = vmatprep.subr.mxu0 0.0
    %107 = vmatpush1.msra.mxu0 0.0
    %108 = vmatprep.subr.mxu0 0.0
    %109 = vmatpush1.msra.mxu0 0.0
    %110 = vmatprep.subr.mxu0 0.0
    %111 = vmatpush1.msra.mxu0 0.0
    %112 = vmatprep.subr.mxu0 0.0
    %113 = vmatpush1.msra.mxu0 0.0
    %114 = vmatprep.subr.mxu0 0.0
    %115 = vmatpush1.msra.mxu0 0.0
    %116 = vmatprep.subr.mxu0 0.0
    %117 = vmatpush1.msra.mxu0 0.0
    %118 = vmatprep.subr.mxu0 0.0
    %119 = vmatpush1.msra.mxu0 0.0
    %120 = vmatprep.subr.mxu0 0.0
    %121 = vmatpush1.msra.mxu0 0.0
    %122 = vmatprep.subr.mxu0 0.0
    %123 = vmatpush1.msra.mxu0 0.0
    %124 = vmatprep.subr.mxu0 0.0
    %125 = vmatpush1.msra.mxu0 0.0
    %126 = vmatprep.subr.mxu0 0.0
    %127 = vmatpush1.msra.mxu0 0.0
    %128 = vmatprep.subr.mxu0 0.0
    %129 = vmatpush1.msra.mxu0 0.0
    %130 = vmatprep.subr.mxu0 0.0
    %131 = vmatpush1.msra.mxu0 0.0
    %132 = vmatprep.subr.mxu0 0.0
    %133 = vmatpush1.msra.mxu0 0.0
    %134 = vmatprep.subr.mxu0 0.0
    %135 = vmatpush1.msra.mxu0 0.0
    %136 = vmatprep.mubr.f32.mxu0 0.0
    %137 = vmatmul.mubr.f32.gmra.mrb[0].mxu0 %v70
    %v138 = vpop.f32.mrb[0].mxu0
    %v139 = vadd.f32 0.0, %v138
    %v140 = vpop.f32.mrb[0].mxu0
    %141 = vdwg.mxu0
    %v142 = vld [vmem:[%s2] sm:$0x1]
    %v143 = vld [vmem:[%s3] sm:$0x1]
    %v144 = vsel %vm68, %v139, 0.0
    %v145 = vrot.slane %v144, 4
    %v146 = vadd.f32 %v144, %v145
    %v147 = vrot.slane %v146, 2
    %v148 = vadd.f32 %v146, %v147
    %v149 = vrot.slane %v148, 1
    %v150 = vadd.f32 %v148, %v149
    %v151 = vrcp.pop 8.0
    %v152 = vmul.f32 %v150, %v151
    %v153 = vsub.f32 %v139, %v152
    %v154 = vmul.f32 %v153, %v153
    %v155 = vsel %vm68, %v154, 0.0
    %v156 = vrot.slane %v155, 4
    %v157 = vadd.f32 %v155, %v156
    %v158 = vrot.slane %v157, 2
    %v159 = vadd.f32 %v157, %v158
    %v160 = vrot.slane %v159, 1
    %v161 = vadd.f32 %v159, %v160
    %v162 = vmul.f32 %v161, %v151
    %v163 = vadd.f32 %v162, 1e-05
    %v164 = vrsqrt.pop %v163
    %v165 = vmul.f32 %v142, %v164
    %v167 = vlaneseq
    %v168 = vshrl.u32 %v167, 7
    %v169 = vsub.s32 0, %v168
    %v170 = vrot.slane %v165, %v169
    %v172 = vmul.f32 %v153, %v170
    %v174 = vlaneseq
    %v175 = vshrl.u32 %v174, 7
    %v176 = vsub.s32 0, %v175
    %v177 = vrot.slane %v143, %v176
    %v179 = vadd.f32 %v172, %v177
    %v180 = vmax.f32 %v179, 0.0
    %v181 = vld [vmem:[#allocation7] sm:$0xff]
    %v182 = vld [vmem:[#allocation7 + $0x8] sm:$0xff]
    %v183 = vld [vmem:[#allocation7 + $0x10] sm:$0xff]
    %v184 = vld [vmem:[#allocation7 + $0x18] sm:$0xff]
    %v185 = vld [vmem:[%s5] sm:$0x1]
    %v187 = vlaneseq
    %v188 = vshrl.u32 %v187, 7
    %v189 = vsub.s32 0, %v188
    %v190 = vrot.slane %v185, %v189
    %v193 = vsel %vm68, %v180, 0
    %195 = vmatprep.subr.mxu0 0.0
    %196 = vmatpush1.msra.mxu0 %v181
    %197 = vmatprep.subr.mxu0 0.0
    %198 = vmatpush1.msra.mxu0 %v182
    %199 = vmatprep.subr.mxu0 0.0
    %200 = vmatpush1.msra.mxu0 %v183
    %201 = vmatprep.subr.mxu0 0.0
    %202 = vmatpush1.msra.mxu0 %v184
    %203 = vmatprep.subr.mxu0 0.0
    %204 = vmatpush1.msra.mxu0 0.0
    %205 = vmatprep.subr.mxu0 0.0
    %206 = vmatpush1.msra.mxu0 0.0
    %207 = vmatprep.subr.mxu0 0.0
    %208 = vmatpush1.msra.mxu0 0.0
    %209 = vmatprep.subr.mxu0 0.0
    %210 = vmatpush1.msra.mxu0 0.0
    %211 = vmatprep.subr.mxu0 0.0
    %212 = vmatpush1.msra.mxu0 0.0
    %213 = vmatprep.subr.mxu0 0.0
    %214 = vmatpush1.msra.mxu0 0.0
    %215 = vmatprep.subr.mxu0 0.0
    %216 = vmatpush1.msra.mxu0 0.0
    %217 = vmatprep.subr.mxu0 0.0
    %218 = vmatpush1.msra.mxu0 0.0
    %219 = vmatprep.subr.mxu0 0.0
    %220 = vmatpush1.msra.mxu0 0.0
    %221 = vmatprep.subr.mxu0 0.0
    %222 = vmatpush1.msra.mxu0 0.0
    %223 = vmatprep.subr.mxu0 0.0
    %224 = vmatpush1.msra.mxu0 0.0
    %225 = vmatprep.subr.mxu0 0.0
    %226 = vmatpush1.msra.mxu0 0.0
    %227 = vmatprep.subr.mxu0 0.0
    %228 = vmatpush1.msra.mxu0 0.0
    %229 = vmatprep.subr.mxu0 0.0
    %230 = vmatpush1.msra.mxu0 0.0
    %231 = vmatprep.subr.mxu0 0.0
    %232 = vmatpush1.msra.mxu0 0.0
    %233 = vmatprep.subr.mxu0 0.0
    %234 = vmatpush1.msra.mxu0 0.0
    %235 = vmatprep.subr.mxu0 0.0
    %236 = vmatpush1.msra.mxu0 0.0
    %237 = vmatprep.subr.mxu0 0.0
    %238 = vmatpush1.msra.mxu0 0.0
    %239 = vmatprep.subr.mxu0 0.0
    %240 = vmatpush1.msra.mxu0 0.0
    %241 = vmatprep.subr.mxu0 0.0
    %242 = vmatpush1.msra.mxu0 0.0
    %243 = vmatprep.subr.mxu0 0.0
    %244 = vmatpush1.msra.mxu0 0.0
    %245 = vmatprep.subr.mxu0 0.0
    %246 = vmatpush1.msra.mxu0 0.0
    %247 = vmatprep.subr.mxu0 0.0
    %248 = vmatpush1.msra.mxu0 0.0
    %249 = vmatprep.subr.mxu0 0.0
    %250 = vmatpush1.msra.mxu0 0.0
    %251 = vmatprep.subr.mxu0 0.0
    %252 = vmatpush1.msra.mxu0 0.0
    %253 = vmatprep.subr.mxu0 0.0
    %254 = vmatpush1.msra.mxu0 0.0
    %255 = vmatprep.subr.mxu0 0.0
    %256 = vmatpush1.msra.mxu0 0.0
    %257 = vmatprep.subr.mxu0 0.0
    %258 = vmatpush1.msra.mxu0 0.0
    %259 = vmatprep.mubr.f32.mxu0 0.0
    %260 = vmatmul.mubr.f32.gmra.mrb[0].mxu0 %v193
    %v261 = vpop.f32.mrb[0].mxu0
    %v262 = vadd.f32 %v190, %v261
    %v263 = vpop.f32.mrb[0].mxu0
    %264 = vdwg.mxu0
    %265 = vst [vmem:[#allocation8] sm:$0xff] %v262
    // Predicated region
    $region38: #{tpu_custom_call.1} parent=1 // pred_check
      _
    $region39: #{tpu_custom_call.1} parent=1 // pred_check_branch
      %267 = sbr.rel (0) target = $region41
    $region40: #{tpu_custom_call.1} parent=1 // pred_region
      %s269 = ssub.s32 128, 128
      %270 = vsyncadd [#allocation4], %s269
      %s272 = sshll.u32 [#allocation8], 4
      %s273 = int_to_ptr.vmem [resolvable:$true] %s272
      %275 = dma.vmem_to_hbm [thread:$0]  %s273, 128, %s6, [#allocation4]
    $region41: #{tpu_custom_call.1} parent=1 // pred_fallthru
      _
    // Predicated region
    $region42: #{tpu_custom_call.1} parent=1 // pred_check
      _
    $region43: #{tpu_custom_call.1} parent=1 // pred_check_branch
      %277 = sbr.rel (0) target = $region45
    $region44: #{tpu_custom_call.1} parent=1 // pred_region
      %278 = dma.done [#allocation4], 128
    $region45: #{tpu_custom_call.1} parent=1 // pred_fallthru
      _
    %279 = vsyncpa [#allocation3], 1
    %280 = vsyncpa [#allocation6], 1
    %281 = vsyncpa [#allocation4], 1

</llo_original>
